<compile_context>
chip_gen: v7x
topology: tpu7x:2x2x1
jax: 0.10.0
libtpu: 0.0.40
codegen_flags: <defaults>
</compile_context>

<pallas_src>
import jax
import jax.numpy as jnp
from jax import lax
from jax.experimental import pallas as pl
from jax.experimental.pallas import tpu as pltpu


def _fused_stream_conv_kernel(
    x_ref, buf1_ref, buf2_ref, w1_ref, w2_ref,       # inputs
    y_ref, obuf1_ref, obuf2_ref,                     # outputs
    col1_s, col2_s,                                  # VMEM scratch
):
    # x_ref:    [B, Cin, T]
    # buf1_ref: [B, Cin, K-1]        buf2_ref: [B, Cmid, K-1]
    # w1_ref:   [Cmid, K*Cin + 1]    w2_ref:   [Cout, K*Cmid + 1]
    #           (tap-major flat weights, last column = bias)
    # y_ref:    [Cout, B*T]          (lane-dense slab; wrapper reshapes)
    # col1_s:   [K*Cin + 1, B*T]     col2_s:   [K*Cmid + 1, B*T]
    B, cin, T = x_ref.shape
    km1 = buf1_ref.shape[2]
    K = km1 + 1
    cmid = buf2_ref.shape[1]

    # Ones row for the folded bias (last row of each im2col matrix).
    col1_s[K * cin:K * cin + 1, :] = jnp.ones((1, B * T), dtype=col1_s.dtype)
    col2_s[K * cmid:K * cmid + 1, :] = jnp.ones((1, B * T), dtype=col2_s.dtype)

    # ---- layer 1: im2col over all batches, one MXU matmul -------------------
    for b in range(B):
        xb = x_ref[b]          # [Cin, T]
        hb = buf1_ref[b]       # [Cin, K-1]
        for k in range(K):
            nb = km1 - k       # history columns contributed by this tap
            r0 = k * cin
            if nb > 0:
                col1_s[r0:r0 + cin, b * T:b * T + nb] = hb[:, k:]
            col1_s[r0:r0 + cin, b * T + nb:(b + 1) * T] = xb[:, :T - nb]
        # new layer-1 stream state = last K-1 frames of this chunk
        obuf1_ref[b] = xb[:, T - km1:]

    y1 = jnp.dot(w1_ref[...], col1_s[...], preferred_element_type=jnp.float32)
    y1 = y1.astype(x_ref.dtype)            # [Cmid, B*T], stays in VMEM

    # ---- layer 2 on the VMEM-resident y1 (no HBM round trip) ----------------
    for b in range(B):
        hb = buf2_ref[b]       # [Cmid, K-1]
        for k in range(K):
            nb = km1 - k
            r0 = k * cmid
            if nb > 0:
                col2_s[r0:r0 + cmid, b * T:b * T + nb] = hb[:, k:]
            col2_s[r0:r0 + cmid, b * T + nb:(b + 1) * T] = (
                y1[:, b * T:b * T + T - nb])
        obuf2_ref[b] = y1[:, (b + 1) * T - km1:(b + 1) * T]

    y2 = jnp.dot(w2_ref[...], col2_s[...], preferred_element_type=jnp.float32)
    y_ref[...] = y2.astype(y_ref.dtype)


def conv_model_forward(x, in_buffers, params):
    """Pallas equivalent of ConvModel.forward(x, in_buffers).

    x:          [B, C_in, T]
    in_buffers: ([B, C_in, K-1], [B, C_mid, K-1])
    params:     ((w1 [C_mid, C_in, K], b1 [C_mid]),
                 (w2 [C_out, C_mid, K], b2 [C_out]))
    returns     (y [B, C_out, T], (out_buf1, out_buf2))
    """
    (w1, b1), (w2, b2) = params
    buf1, buf2 = in_buffers
    B, cin, T = x.shape
    cmid, _, K = w1.shape
    cout = w2.shape[0]
    km1 = K - 1
    assert km1 >= 1, "streaming conv expects kernel_size >= 2"
    assert T >= km1, "chunk must be at least kernel_size - 1 frames"
    assert buf1.shape == (B, cin, km1) and buf2.shape == (B, cmid, km1)

    dt = x.dtype
    # Tap-major flat weights with the bias folded in as the last column:
    #   w_flat[o, k*C + c] == w[o, c, k];  w_flat[o, K*C] == bias[o]
    w1f = jnp.concatenate(
        [jnp.transpose(w1, (0, 2, 1)).reshape(cmid, K * cin), b1[:, None]],
        axis=1).astype(dt)
    w2f = jnp.concatenate(
        [jnp.transpose(w2, (0, 2, 1)).reshape(cout, K * cmid), b2[:, None]],
        axis=1).astype(dt)

    vmem = pltpu.MemorySpace.VMEM
    out_shape = (
        jax.ShapeDtypeStruct((cout, B * T), dt),     # lane-dense y slab
        jax.ShapeDtypeStruct((B, cin, km1), dt),     # out_buf1
        jax.ShapeDtypeStruct((B, cmid, km1), dt),    # out_buf2
    )
    y_slab, obuf1, obuf2 = pl.pallas_call(
        _fused_stream_conv_kernel,
        out_shape=out_shape,
        # Single invocation (no grid): the whole streaming chunk fits VMEM, so
        # we pay one launch and zero per-step pipeline overhead.
        in_specs=[pl.BlockSpec(memory_space=vmem)] * 5,
        out_specs=(
            pl.BlockSpec(memory_space=vmem),
            pl.BlockSpec(memory_space=vmem),
            pl.BlockSpec(memory_space=vmem),
        ),
        scratch_shapes=[
            pltpu.VMEM((K * cin + 1, B * T), dt),    # im2col + ones, layer 1
            pltpu.VMEM((K * cmid + 1, B * T), dt),   # im2col + ones, layer 2
        ],
        compiler_params=pltpu.CompilerParams(
            # Tiny footprint here; 32 MiB is safely under every generation's
            # physical VMEM (raise when T tiles become real on v5e/v6e).
            vmem_limit_bytes=32 * 1024 * 1024,
        ),
    )(x, buf1, buf2, w1f, w2f)

    # Layout plumbing back to [B, C_out, T] (slab column index = b*T + t).
    y = jnp.transpose(y_slab.reshape(cout, B, T), (1, 0, 2))
    return y, (obuf1, obuf2)


def _conv1d_valid_ref(xcat, w, b):
    # pure-JAX reference (VALID conv over the buffer-prepended input)
    y = lax.conv_general_dilated(
        xcat, w, window_strides=(1,), padding="VALID",
        dimension_numbers=("NCH", "OIH", "NCH"))
    return y + b[None, :, None]


if __name__ == "__main__":
    # Small shapes consistent with the module: two stacked streaming Conv1d layers.
    B, C_IN, C_MID, C_OUT, T, K = 2, 4, 8, 8, 16, 3

    key = jax.random.PRNGKey(0)
    kx, kb1, kb2, kw1, kw2, kbi1, kbi2 = jax.random.split(key, 7)

    x = jax.random.normal(kx, (B, C_IN, T), jnp.float32)
    in_buffers = (
        jax.random.normal(kb1, (B, C_IN, K - 1), jnp.float32),
        jax.random.normal(kb2, (B, C_MID, K - 1), jnp.float32),
    )
    # Deterministic parameter init (synthetic; shapes from the module's layers).
    w1 = 0.1 * jax.random.normal(kw1, (C_MID, C_IN, K), jnp.float32)
    b1 = 0.1 * jax.random.normal(kbi1, (C_MID,), jnp.float32)
    w2 = 0.1 * jax.random.normal(kw2, (C_OUT, C_MID, K), jnp.float32)
    b2 = 0.1 * jax.random.normal(kbi2, (C_OUT,), jnp.float32)
    params = ((w1, b1), (w2, b2))

    y, out_buffers = jax.block_until_ready(
        conv_model_forward(x, in_buffers, params))

    # Pure-JAX reference check of the whole forward.
    xcat1 = jnp.concatenate([in_buffers[0], x], axis=-1)
    y1_ref = _conv1d_valid_ref(xcat1, w1, b1)
    xcat2 = jnp.concatenate([in_buffers[1], y1_ref], axis=-1)
    y_ref = _conv1d_valid_ref(xcat2, w2, b2)
    buf_ref = (xcat1[:, :, -(K - 1):], xcat2[:, :, -(K - 1):])

    assert y.shape == (B, C_OUT, T)
    assert out_buffers[0].shape == (B, C_IN, K - 1)
    assert out_buffers[1].shape == (B, C_MID, K - 1)
    assert jnp.allclose(y, y_ref, atol=1e-5, rtol=1e-5)
    assert jnp.allclose(out_buffers[0], buf_ref[0], atol=1e-6)
    assert jnp.allclose(out_buffers[1], buf_ref[1], atol=1e-5)
    print("KERNEL_OK")
</pallas_src>

<mosaic_0001>
module attributes {stable_mosaic.version = 11 : i64} {
  func.func @_fused_stream_conv_kernel(%arg0: memref<2x4x16xf32, #tpu.memory_space<vmem>>, %arg1: memref<2x4x2xf32, #tpu.memory_space<vmem>>, %arg2: memref<2x8x2xf32, #tpu.memory_space<vmem>>, %arg3: memref<8x13xf32, #tpu.memory_space<vmem>>, %arg4: memref<8x25xf32, #tpu.memory_space<vmem>>, %arg5: memref<8x32xf32, #tpu.memory_space<vmem>>, %arg6: memref<2x4x2xf32, #tpu.memory_space<vmem>>, %arg7: memref<2x8x2xf32, #tpu.memory_space<vmem>>, %arg8: memref<13x32xf32, #tpu.memory_space<vmem>>, %arg9: memref<25x32xf32, #tpu.memory_space<vmem>>) attributes {dimension_semantics = [], scalar_prefetch = 0 : i64, scratch_operands = 2 : i64, tpu.core_type = #tpu.core_type<tc>} {
    %cst = arith.constant 1.000000e+00 : f32
    %0 = vector.broadcast %cst : f32 to vector<1x32xf32>
    %c12 = arith.constant 12 : index
    %c0 = arith.constant 0 : index
    %1 = vector.load %arg8[%c12, %c0] : memref<13x32xf32, #tpu.memory_space<vmem>>, vector<1x32xf32>
    tpu.vector_store %arg8[%c12, %c0], %0 {strides = array<i32>} : memref<13x32xf32, #tpu.memory_space<vmem>>, vector<1x32xf32>,
    %cst_0 = arith.constant 1.000000e+00 : f32
    %2 = vector.broadcast %cst_0 : f32 to vector<1x32xf32>
    %c24 = arith.constant 24 : index
    %c0_1 = arith.constant 0 : index
    %3 = vector.load %arg9[%c24, %c0_1] : memref<25x32xf32, #tpu.memory_space<vmem>>, vector<1x32xf32>
    tpu.vector_store %arg9[%c24, %c0_1], %2 {strides = array<i32>} : memref<25x32xf32, #tpu.memory_space<vmem>>, vector<1x32xf32>,
    %c0_2 = arith.constant 0 : index
    %c0_3 = arith.constant 0 : index
    %c0_4 = arith.constant 0 : index
    %4 = vector.load %arg0[%c0_2, %c0_3, %c0_4] : memref<2x4x16xf32, #tpu.memory_space<vmem>>, vector<1x4x16xf32>
    %5 = vector.shape_cast %4 : vector<1x4x16xf32> to vector<4x16xf32>
    %c0_5 = arith.constant 0 : index
    %c0_6 = arith.constant 0 : index
    %c0_7 = arith.constant 0 : index
    %6 = vector.load %arg1[%c0_5, %c0_6, %c0_7] : memref<2x4x2xf32, #tpu.memory_space<vmem>>, vector<1x4x2xf32>
    %7 = vector.shape_cast %6 : vector<1x4x2xf32> to vector<4x2xf32>
    %c0_8 = arith.constant 0 : index
    %c0_9 = arith.constant 0 : index
    %8 = vector.load %arg8[%c0_8, %c0_9] : memref<13x32xf32, #tpu.memory_space<vmem>>, vector<4x2xf32>
    tpu.vector_store %arg8[%c0_8, %c0_9], %7 {strides = array<i32>} : memref<13x32xf32, #tpu.memory_space<vmem>>, vector<4x2xf32>,
    %9 = vector.extract_strided_slice %5 {offsets = [0, 0], sizes = [4, 14], strides = [1, 1]} : vector<4x16xf32> to vector<4x14xf32>
    %c0_10 = arith.constant 0 : index
    %c2 = arith.constant 2 : index
    %10 = vector.load %arg8[%c0_10, %c2] : memref<13x32xf32, #tpu.memory_space<vmem>>, vector<4x14xf32>
    tpu.vector_store %arg8[%c0_10, %c2], %9 {strides = array<i32>} : memref<13x32xf32, #tpu.memory_space<vmem>>, vector<4x14xf32>,
    %11 = vector.extract_strided_slice %7 {offsets = [0, 1], sizes = [4, 1], strides = [1, 1]} : vector<4x2xf32> to vector<4x1xf32>
    %c4 = arith.constant 4 : index
    %c0_11 = arith.constant 0 : index
    %12 = vector.load %arg8[%c4, %c0_11] : memref<13x32xf32, #tpu.memory_space<vmem>>, vector<4x1xf32>
    tpu.vector_store %arg8[%c4, %c0_11], %11 {strides = array<i32>} : memref<13x32xf32, #tpu.memory_space<vmem>>, vector<4x1xf32>,
    %13 = vector.extract_strided_slice %5 {offsets = [0, 0], sizes = [4, 15], strides = [1, 1]} : vector<4x16xf32> to vector<4x15xf32>
    %c4_12 = arith.constant 4 : index
    %c1 = arith.constant 1 : index
    %14 = vector.load %arg8[%c4_12, %c1] : memref<13x32xf32, #tpu.memory_space<vmem>>, vector<4x15xf32>
    tpu.vector_store %arg8[%c4_12, %c1], %13 {strides = array<i32>} : memref<13x32xf32, #tpu.memory_space<vmem>>, vector<4x15xf32>,
    %c8 = arith.constant 8 : index
    %c0_13 = arith.constant 0 : index
    %15 = vector.load %arg8[%c8, %c0_13] : memref<13x32xf32, #tpu.memory_space<vmem>>, vector<4x16xf32>
    tpu.vector_store %arg8[%c8, %c0_13], %5 {strides = array<i32>} : memref<13x32xf32, #tpu.memory_space<vmem>>, vector<4x16xf32>,
    %16 = vector.extract_strided_slice %5 {offsets = [0, 14], sizes = [4, 2], strides = [1, 1]} : vector<4x16xf32> to vector<4x2xf32>
    %c0_14 = arith.constant 0 : index
    %c0_15 = arith.constant 0 : index
    %c0_16 = arith.constant 0 : index
    %17 = vector.load %arg6[%c0_14, %c0_15, %c0_16] : memref<2x4x2xf32, #tpu.memory_space<vmem>>, vector<1x4x2xf32>
    %18 = vector.shape_cast %17 : vector<1x4x2xf32> to vector<4x2xf32>
    %19 = vector.shape_cast %16 : vector<4x2xf32> to vector<1x4x2xf32>
    tpu.vector_store %arg6[%c0_14, %c0_15, %c0_16], %19 {strides = array<i32>} : memref<2x4x2xf32, #tpu.memory_space<vmem>>, vector<1x4x2xf32>,
    %c1_17 = arith.constant 1 : index
    %c0_18 = arith.constant 0 : index
    %c0_19 = arith.constant 0 : index
    %20 = vector.load %arg0[%c1_17, %c0_18, %c0_19] : memref<2x4x16xf32, #tpu.memory_space<vmem>>, vector<1x4x16xf32>
    %21 = vector.shape_cast %20 : vector<1x4x16xf32> to vector<4x16xf32>
    %c1_20 = arith.constant 1 : index
    %c0_21 = arith.constant 0 : index
    %c0_22 = arith.constant 0 : index
    %22 = vector.load %arg1[%c1_20, %c0_21, %c0_22] : memref<2x4x2xf32, #tpu.memory_space<vmem>>, vector<1x4x2xf32>
    %23 = vector.shape_cast %22 : vector<1x4x2xf32> to vector<4x2xf32>
    %c0_23 = arith.constant 0 : index
    %c16 = arith.constant 16 : index
    %24 = vector.load %arg8[%c0_23, %c16] : memref<13x32xf32, #tpu.memory_space<vmem>>, vector<4x2xf32>
    tpu.vector_store %arg8[%c0_23, %c16], %23 {strides = array<i32>} : memref<13x32xf32, #tpu.memory_space<vmem>>, vector<4x2xf32>,
    %25 = vector.extract_strided_slice %21 {offsets = [0, 0], sizes = [4, 14], strides = [1, 1]} : vector<4x16xf32> to vector<4x14xf32>
    %c0_24 = arith.constant 0 : index
    %c18 = arith.constant 18 : index
    %26 = vector.load %arg8[%c0_24, %c18] : memref<13x32xf32, #tpu.memory_space<vmem>>, vector<4x14xf32>
    tpu.vector_store %arg8[%c0_24, %c18], %25 {strides = array<i32>} : memref<13x32xf32, #tpu.memory_space<vmem>>, vector<4x14xf32>,
    %27 = vector.extract_strided_slice %23 {offsets = [0, 1], sizes = [4, 1], strides = [1, 1]} : vector<4x2xf32> to vector<4x1xf32>
    %c4_25 = arith.constant 4 : index
    %c16_26 = arith.constant 16 : index
    %28 = vector.load %arg8[%c4_25, %c16_26] : memref<13x32xf32, #tpu.memory_space<vmem>>, vector<4x1xf32>
    tpu.vector_store %arg8[%c4_25, %c16_26], %27 {strides = array<i32>} : memref<13x32xf32, #tpu.memory_space<vmem>>, vector<4x1xf32>,
    %29 = vector.extract_strided_slice %21 {offsets = [0, 0], sizes = [4, 15], strides = [1, 1]} : vector<4x16xf32> to vector<4x15xf32>
    %c4_27 = arith.constant 4 : index
    %c17 = arith.constant 17 : index
    %30 = vector.load %arg8[%c4_27, %c17] : memref<13x32xf32, #tpu.memory_space<vmem>>, vector<4x15xf32>
    tpu.vector_store %arg8[%c4_27, %c17], %29 {strides = array<i32>} : memref<13x32xf32, #tpu.memory_space<vmem>>, vector<4x15xf32>,
    %c8_28 = arith.constant 8 : index
    %c16_29 = arith.constant 16 : index
    %31 = vector.load %arg8[%c8_28, %c16_29] : memref<13x32xf32, #tpu.memory_space<vmem>>, vector<4x16xf32>
    tpu.vector_store %arg8[%c8_28, %c16_29], %21 {strides = array<i32>} : memref<13x32xf32, #tpu.memory_space<vmem>>, vector<4x16xf32>,
    %32 = vector.extract_strided_slice %21 {offsets = [0, 14], sizes = [4, 2], strides = [1, 1]} : vector<4x16xf32> to vector<4x2xf32>
    %c1_30 = arith.constant 1 : index
    %c0_31 = arith.constant 0 : index
    %c0_32 = arith.constant 0 : index
    %33 = vector.load %arg6[%c1_30, %c0_31, %c0_32] : memref<2x4x2xf32, #tpu.memory_space<vmem>>, vector<1x4x2xf32>
    %34 = vector.shape_cast %33 : vector<1x4x2xf32> to vector<4x2xf32>
    %35 = vector.shape_cast %32 : vector<4x2xf32> to vector<1x4x2xf32>
    tpu.vector_store %arg6[%c1_30, %c0_31, %c0_32], %35 {strides = array<i32>} : memref<2x4x2xf32, #tpu.memory_space<vmem>>, vector<1x4x2xf32>,
    %c0_33 = arith.constant 0 : index
    %c0_34 = arith.constant 0 : index
    %36 = vector.load %arg3[%c0_33, %c0_34] : memref<8x13xf32, #tpu.memory_space<vmem>>, vector<8x13xf32>
    %c0_35 = arith.constant 0 : index
    %c0_36 = arith.constant 0 : index
    %37 = vector.load %arg8[%c0_35, %c0_36] : memref<13x32xf32, #tpu.memory_space<vmem>>, vector<13x32xf32>
    %cst_37 = arith.constant dense<0.000000e+00> : vector<8x32xf32>
    %38 = tpu.matmul %36, %37, %cst_37 {dimension_numbers = #tpu.dot_dimension_numbers<[1], [0], [0], [1], [0, 0, 1, 1], [], []>} : vector<8x13xf32>, vector<13x32xf32>, vector<8x32xf32> -> vector<8x32xf32>
    %c0_38 = arith.constant 0 : index
    %c0_39 = arith.constant 0 : index
    %c0_40 = arith.constant 0 : index
    %39 = vector.load %arg2[%c0_38, %c0_39, %c0_40] : memref<2x8x2xf32, #tpu.memory_space<vmem>>, vector<1x8x2xf32>
    %40 = vector.shape_cast %39 : vector<1x8x2xf32> to vector<8x2xf32>
    %c0_41 = arith.constant 0 : index
    %c0_42 = arith.constant 0 : index
    %41 = vector.load %arg9[%c0_41, %c0_42] : memref<25x32xf32, #tpu.memory_space<vmem>>, vector<8x2xf32>
    tpu.vector_store %arg9[%c0_41, %c0_42], %40 {strides = array<i32>} : memref<25x32xf32, #tpu.memory_space<vmem>>, vector<8x2xf32>,
    %42 = vector.extract_strided_slice %38 {offsets = [0, 0], sizes = [8, 14], strides = [1, 1]} : vector<8x32xf32> to vector<8x14xf32>
    %c0_43 = arith.constant 0 : index
    %c2_44 = arith.constant 2 : index
    %43 = vector.load %arg9[%c0_43, %c2_44] : memref<25x32xf32, #tpu.memory_space<vmem>>, vector<8x14xf32>
    tpu.vector_store %arg9[%c0_43, %c2_44], %42 {strides = array<i32>} : memref<25x32xf32, #tpu.memory_space<vmem>>, vector<8x14xf32>,
    %44 = vector.extract_strided_slice %40 {offsets = [0, 1], sizes = [8, 1], strides = [1, 1]} : vector<8x2xf32> to vector<8x1xf32>
    %c8_45 = arith.constant 8 : index
    %c0_46 = arith.constant 0 : index
    %45 = vector.load %arg9[%c8_45, %c0_46] : memref<25x32xf32, #tpu.memory_space<vmem>>, vector<8x1xf32>
    tpu.vector_store %arg9[%c8_45, %c0_46], %44 {strides = array<i32>} : memref<25x32xf32, #tpu.memory_space<vmem>>, vector<8x1xf32>,
    %46 = vector.extract_strided_slice %38 {offsets = [0, 0], sizes = [8, 15], strides = [1, 1]} : vector<8x32xf32> to vector<8x15xf32>
    %c8_47 = arith.constant 8 : index
    %c1_48 = arith.constant 1 : index
    %47 = vector.load %arg9[%c8_47, %c1_48] : memref<25x32xf32, #tpu.memory_space<vmem>>, vector<8x15xf32>
    tpu.vector_store %arg9[%c8_47, %c1_48], %46 {strides = array<i32>} : memref<25x32xf32, #tpu.memory_space<vmem>>, vector<8x15xf32>,
    %48 = vector.extract_strided_slice %38 {offsets = [0, 0], sizes = [8, 16], strides = [1, 1]} : vector<8x32xf32> to vector<8x16xf32>
    %c16_49 = arith.constant 16 : index
    %c0_50 = arith.constant 0 : index
    %49 = vector.load %arg9[%c16_49, %c0_50] : memref<25x32xf32, #tpu.memory_space<vmem>>, vector<8x16xf32>
    tpu.vector_store %arg9[%c16_49, %c0_50], %48 {strides = array<i32>} : memref<25x32xf32, #tpu.memory_space<vmem>>, vector<8x16xf32>,
    %50 = vector.extract_strided_slice %38 {offsets = [0, 14], sizes = [8, 2], strides = [1, 1]} : vector<8x32xf32> to vector<8x2xf32>
    %c0_51 = arith.constant 0 : index
    %c0_52 = arith.constant 0 : index
    %c0_53 = arith.constant 0 : index
    %51 = vector.load %arg7[%c0_51, %c0_52, %c0_53] : memref<2x8x2xf32, #tpu.memory_space<vmem>>, vector<1x8x2xf32>
    %52 = vector.shape_cast %51 : vector<1x8x2xf32> to vector<8x2xf32>
    %53 = vector.shape_cast %50 : vector<8x2xf32> to vector<1x8x2xf32>
    tpu.vector_store %arg7[%c0_51, %c0_52, %c0_53], %53 {strides = array<i32>} : memref<2x8x2xf32, #tpu.memory_space<vmem>>, vector<1x8x2xf32>,
    %c1_54 = arith.constant 1 : index
    %c0_55 = arith.constant 0 : index
    %c0_56 = arith.constant 0 : index
    %54 = vector.load %arg2[%c1_54, %c0_55, %c0_56] : memref<2x8x2xf32, #tpu.memory_space<vmem>>, vector<1x8x2xf32>
    %55 = vector.shape_cast %54 : vector<1x8x2xf32> to vector<8x2xf32>
    %c0_57 = arith.constant 0 : index
    %c16_58 = arith.constant 16 : index
    %56 = vector.load %arg9[%c0_57, %c16_58] : memref<25x32xf32, #tpu.memory_space<vmem>>, vector<8x2xf32>
    tpu.vector_store %arg9[%c0_57, %c16_58], %55 {strides = array<i32>} : memref<25x32xf32, #tpu.memory_space<vmem>>, vector<8x2xf32>,
    %57 = vector.extract_strided_slice %38 {offsets = [0, 16], sizes = [8, 14], strides = [1, 1]} : vector<8x32xf32> to vector<8x14xf32>
    %c0_59 = arith.constant 0 : index
    %c18_60 = arith.constant 18 : index
    %58 = vector.load %arg9[%c0_59, %c18_60] : memref<25x32xf32, #tpu.memory_space<vmem>>, vector<8x14xf32>
    tpu.vector_store %arg9[%c0_59, %c18_60], %57 {strides = array<i32>} : memref<25x32xf32, #tpu.memory_space<vmem>>, vector<8x14xf32>,
    %59 = vector.extract_strided_slice %55 {offsets = [0, 1], sizes = [8, 1], strides = [1, 1]} : vector<8x2xf32> to vector<8x1xf32>
    %c8_61 = arith.constant 8 : index
    %c16_62 = arith.constant 16 : index
    %60 = vector.load %arg9[%c8_61, %c16_62] : memref<25x32xf32, #tpu.memory_space<vmem>>, vector<8x1xf32>
    tpu.vector_store %arg9[%c8_61, %c16_62], %59 {strides = array<i32>} : memref<25x32xf32, #tpu.memory_space<vmem>>, vector<8x1xf32>,
    %61 = vector.extract_strided_slice %38 {offsets = [0, 16], sizes = [8, 15], strides = [1, 1]} : vector<8x32xf32> to vector<8x15xf32>
    %c8_63 = arith.constant 8 : index
    %c17_64 = arith.constant 17 : index
    %62 = vector.load %arg9[%c8_63, %c17_64] : memref<25x32xf32, #tpu.memory_space<vmem>>, vector<8x15xf32>
    tpu.vector_store %arg9[%c8_63, %c17_64], %61 {strides = array<i32>} : memref<25x32xf32, #tpu.memory_space<vmem>>, vector<8x15xf32>,
    %63 = vector.extract_strided_slice %38 {offsets = [0, 16], sizes = [8, 16], strides = [1, 1]} : vector<8x32xf32> to vector<8x16xf32>
    %c16_65 = arith.constant 16 : index
    %c16_66 = arith.constant 16 : index
    %64 = vector.load %arg9[%c16_65, %c16_66] : memref<25x32xf32, #tpu.memory_space<vmem>>, vector<8x16xf32>
    tpu.vector_store %arg9[%c16_65, %c16_66], %63 {strides = array<i32>} : memref<25x32xf32, #tpu.memory_space<vmem>>, vector<8x16xf32>,
    %65 = vector.extract_strided_slice %38 {offsets = [0, 30], sizes = [8, 2], strides = [1, 1]} : vector<8x32xf32> to vector<8x2xf32>
    %c1_67 = arith.constant 1 : index
    %c0_68 = arith.constant 0 : index
    %c0_69 = arith.constant 0 : index
    %66 = vector.load %arg7[%c1_67, %c0_68, %c0_69] : memref<2x8x2xf32, #tpu.memory_space<vmem>>, vector<1x8x2xf32>
    %67 = vector.shape_cast %66 : vector<1x8x2xf32> to vector<8x2xf32>
    %68 = vector.shape_cast %65 : vector<8x2xf32> to vector<1x8x2xf32>
    tpu.vector_store %arg7[%c1_67, %c0_68, %c0_69], %68 {strides = array<i32>} : memref<2x8x2xf32, #tpu.memory_space<vmem>>, vector<1x8x2xf32>,
    %c0_70 = arith.constant 0 : index
    %c0_71 = arith.constant 0 : index
    %69 = vector.load %arg4[%c0_70, %c0_71] : memref<8x25xf32, #tpu.memory_space<vmem>>, vector<8x25xf32>
    %c0_72 = arith.constant 0 : index
    %c0_73 = arith.constant 0 : index
    %70 = vector.load %arg9[%c0_72, %c0_73] : memref<25x32xf32, #tpu.memory_space<vmem>>, vector<25x32xf32>
    %cst_74 = arith.constant dense<0.000000e+00> : vector<8x32xf32>
    %71 = tpu.matmul %69, %70, %cst_74 {dimension_numbers = #tpu.dot_dimension_numbers<[1], [0], [0], [1], [0, 0, 1, 1], [], []>} : vector<8x25xf32>, vector<25x32xf32>, vector<8x32xf32> -> vector<8x32xf32>
    %c0_75 = arith.constant 0 : index
    %c0_76 = arith.constant 0 : index
    %72 = vector.load %arg5[%c0_75, %c0_76] : memref<8x32xf32, #tpu.memory_space<vmem>>, vector<8x32xf32>
    tpu.vector_store %arg5[%c0_75, %c0_76], %71 {strides = array<i32>} : memref<8x32xf32, #tpu.memory_space<vmem>>, vector<8x32xf32>,
    return
  }
}

</mosaic_0001>

<llo_original>
// kernel: tpu_custom_call.1
$region0: #{tpu_custom_call.1}
  #allocation0 [shape = 'u32[]', space=smem, size = 0x4, offset = 0x4, fixed_abs, tag = 'smem constant byte address 0x4 - core index']
  #allocation1 [shape = 'u32[144,128]{1,0:T(1,128)}', space=vmem, size = 0x12000, scoped, tag = 'internal scratch']
  #allocation2 [shape = 'f32[13,32]{1,0:T(8,128)}', space=vmem, size = 0x2000, scoped, tag = 'scratch operand']
  #allocation3 [shape = 'f32[25,32]{1,0:T(8,128)}', space=vmem, size = 0x4000, scoped, tag = 'scratch operand']
  %s0 = inlined_call_operand.vmem [shape: f32[2,4,16], index: 0, kind: input, shape index: {}]
  %s1 = inlined_call_operand.vmem [shape: f32[2,4,2], index: 1, kind: input, shape index: {}]
  %s2 = inlined_call_operand.vmem [shape: f32[2,8,2], index: 2, kind: input, shape index: {}]
  %s3 = inlined_call_operand.vmem [shape: f32[8,13], index: 3, kind: input, shape index: {}]
  %s4 = inlined_call_operand.vmem [shape: f32[8,25], index: 4, kind: input, shape index: {}]
  %s5 = inlined_call_operand.hbm [shape: f32[8,32], index: 5, kind: output, shape index: {0}]
  %s6 = inlined_call_operand.vmem [shape: f32[2,4,2], index: 6, kind: output, shape index: {1}]
  %s7 = inlined_call_operand.vmem [shape: f32[2,8,2], index: 7, kind: output, shape index: {2}]
  %8 = xla_tuple %s5, %s6, %s7
  %s9 = sld [smem:[#allocation0]]
  $region46: #{tpu_custom_call.1} parent=0
    _
  %s11 = ssub.s32 1, %s9
  %s12 = scalar_select 0, %s11, %s9
  $region1: #{tpu_custom_call.1} parent=0
    #allocation4 [shape = 'u8[4096]{0}', space=vmem, size = 0x1000, scoped, tag = 'output window, operand 0, single buffered']
    #allocation5 [shape = 's32[1]{0}', space=sflag, size = 0x4, scoped, tag = 'scoped memory for tpu_custom_call.1']
    %13 = vsyncpa [#allocation5], 0
    // Predicated region
    $region2: #{tpu_custom_call.1} parent=1 // pred_check
      _
    $region3: #{tpu_custom_call.1} parent=1 // pred_check_branch
      %15 = sbr.rel (0) target = $region5
    $region4: #{tpu_custom_call.1} parent=1 // pred_region
      _
    $region5: #{tpu_custom_call.1} parent=1 // pred_fallthru
      _
    // Predicated region
    $region6: #{tpu_custom_call.1} parent=1 // pred_check
      _
    $region7: #{tpu_custom_call.1} parent=1 // pred_check_branch
      %17 = sbr.rel (0) target = $region9
    $region8: #{tpu_custom_call.1} parent=1 // pred_region
      _
    $region9: #{tpu_custom_call.1} parent=1 // pred_fallthru
      _
    // Predicated region
    $region10: #{tpu_custom_call.1} parent=1 // pred_check
      _
    $region11: #{tpu_custom_call.1} parent=1 // pred_check_branch
      %19 = sbr.rel (0) target = $region13
    $region12: #{tpu_custom_call.1} parent=1 // pred_region
      _
    $region13: #{tpu_custom_call.1} parent=1 // pred_fallthru
      _
    // Predicated region
    $region14: #{tpu_custom_call.1} parent=1 // pred_check
      _
    $region15: #{tpu_custom_call.1} parent=1 // pred_check_branch
      %21 = sbr.rel (0) target = $region17
    $region16: #{tpu_custom_call.1} parent=1 // pred_region
      _
    $region17: #{tpu_custom_call.1} parent=1 // pred_fallthru
      _
    // Predicated region
    $region18: #{tpu_custom_call.1} parent=1 // pred_check
      _
    $region19: #{tpu_custom_call.1} parent=1 // pred_check_branch
      %23 = sbr.rel (0) target = $region21
    $region20: #{tpu_custom_call.1} parent=1 // pred_region
      _
    $region21: #{tpu_custom_call.1} parent=1 // pred_fallthru
      _
    %vm24 = vcmask 253952
    %25 = vst.msk [vmem:[#allocation2 + $0xc] sm:$0x1] %vm24, 1.0
    %26 = vst.msk [vmem:[#allocation3 + $0x18] sm:$0x1] %vm24, 1.0
    %v27 = vld [vmem:[%s0] sm:$0xf]
    %v28 = vld [vmem:[%s1] sm:$0xf]
    %vm29 = vcmask 11264
    %30 = vst.msk [vmem:[#allocation2] sm:$0xf] %vm29, %v28
    %32 = vrot.lane.b32.xlu0 %v27, 2
    %v33 = vpop.permute.xlu0 %32
    %vm35 = vcmask 125968
    %36 = vst.msk [vmem:[#allocation2] sm:$0xf] %vm35, %v33
    %38 = vrot.lane.b32.xlu0 %v28, 127
    %v39 = vpop.permute.xlu0 %38
    %vm41 = vcmask 3072
    %42 = vst.msk [vmem:[#allocation2 + $0x4] sm:$0xf] %vm41, %v39
    %43 = vrot.lane.b32.xlu0 %v27, 1
    %v44 = vpop.permute.xlu0 %43
    %vm46 = vcmask 125960
    %47 = vst.msk [vmem:[#allocation2 + $0x4] sm:$0xf] %vm46, %v44
    %vm48 = vcmask 125952
    %49 = vst.msk [vmem:[#allocation2 + $0x8] sm:$0xf] %vm48, %v27
    %50 = vrot.lane.b32.xlu0 %v27, 114
    %v51 = vpop.permute.xlu0 %50
    %53 = vst.msk [vmem:[%s6] sm:$0xf] %vm29, %v51
    %s54 = scalar_lea.vmem %s0, 4
    %v55 = vld [vmem:[%s54] sm:$0xf]
    %s56 = scalar_lea.vmem %s1, 4
    %v57 = vld [vmem:[%s56] sm:$0xf]
    %59 = vrot.lane.b32.xlu0 %v57, 16
    %v60 = vpop.permute.xlu0 %59
    %vm62 = vcmask 142464
    %63 = vst.msk [vmem:[#allocation2] sm:$0xf] %vm62, %v60
    %65 = vrot.lane.b32.xlu0 %v55, 18
    %v66 = vpop.permute.xlu0 %65
    %vm68 = vcmask 257168
    %69 = vst.msk [vmem:[#allocation2] sm:$0xf] %vm68, %v66
    %70 = vrot.lane.b32.xlu0 %v57, 15
    %v71 = vpop.permute.xlu0 %70
    %vm73 = vcmask 134272
    %74 = vst.msk [vmem:[#allocation2 + $0x4] sm:$0xf] %vm73, %v71
    %75 = vrot.lane.b32.xlu0 %v55, 17
    %v76 = vpop.permute.xlu0 %75
    %vm78 = vcmask 257160
    %79 = vst.msk [vmem:[#allocation2 + $0x4] sm:$0xf] %vm78, %v76
    %80 = vrot.lane.b32.xlu0 %v55, 16
    %v81 = vpop.permute.xlu0 %80
    %vm83 = vcmask 257152
    %84 = vst.msk [vmem:[#allocation2 + $0x8] sm:$0xf] %vm83, %v81
    %85 = vrot.lane.b32.xlu0 %v55, 114
    %v86 = vpop.permute.xlu0 %85
    %s88 = scalar_lea.vmem %s6, 4
    %89 = vst.msk [vmem:[%s88] sm:$0xf] %vm29, %v86
    %v90 = vld [vmem:[%s3] sm:$0xff]
    %v91 = vld [vmem:[#allocation2] sm:$0xff]
    %v92 = vld [vmem:[#allocation2 + $0x8] sm:$0x1f]
    %vm93 = vcmask 105472
    %v95 = vsel %vm93, %v90, 0
    %vm97 = vcmask 1044480
    %v99 = vsel %vm97, %v92, 0
    %101 = vmatprep.subr.mxu0 0.0
    %102 = vmatpush1.msra.mxu0 %v91
    %103 = vmatprep.subr.mxu0 0.0
    %104 = vmatpush1.msra.mxu0 %v99
    %105 = vmatprep.subr.mxu0 0.0
    %106 = vmatpush1.msra.mxu0 0.0
    %107 = vmatprep.subr.mxu0 0.0
    %108 = vmatpush1.msra.mxu0 0.0
    %109 = vmatprep.subr.mxu0 0.0
    %110 = vmatpush1.msra.mxu0 0.0
    %111 = vmatprep.subr.mxu0 0.0
    %112 = vmatpush1.msra.mxu0 0.0
    %113 = vmatprep.subr.mxu0 0.0
    %114 = vmatpush1.msra.mxu0 0.0
    %115 = vmatprep.subr.mxu0 0.0
    %116 = vmatpush1.msra.mxu0 0.0
    %117 = vmatprep.subr.mxu0 0.0
    %118 = vmatpush1.msra.mxu0 0.0
    %119 = vmatprep.subr.mxu0 0.0
    %120 = vmatpush1.msra.mxu0 0.0
    %121 = vmatprep.subr.mxu0 0.0
    %122 = vmatpush1.msra.mxu0 0.0
    %123 = vmatprep.subr.mxu0 0.0
    %124 = vmatpush1.msra.mxu0 0.0
    %125 = vmatprep.subr.mxu0 0.0
    %126 = vmatpush1.msra.mxu0 0.0
    %127 = vmatprep.subr.mxu0 0.0
    %128 = vmatpush1.msra.mxu0 0.0
    %129 = vmatprep.subr.mxu0 0.0
    %130 = vmatpush1.msra.mxu0 0.0
    %131 = vmatprep.subr.mxu0 0.0
    %132 = vmatpush1.msra.mxu0 0.0
    %133 = vmatprep.subr.mxu0 0.0
    %134 = vmatpush1.msra.mxu0 0.0
    %135 = vmatprep.subr.mxu0 0.0
    %136 = vmatpush1.msra.mxu0 0.0
    %137 = vmatprep.subr.mxu0 0.0
    %138 = vmatpush1.msra.mxu0 0.0
    %139 = vmatprep.subr.mxu0 0.0
    %140 = vmatpush1.msra.mxu0 0.0
    %141 = vmatprep.subr.mxu0 0.0
    %142 = vmatpush1.msra.mxu0 0.0
    %143 = vmatprep.subr.mxu0 0.0
    %144 = vmatpush1.msra.mxu0 0.0
    %145 = vmatprep.subr.mxu0 0.0
    %146 = vmatpush1.msra.mxu0 0.0
    %147 = vmatprep.subr.mxu0 0.0
    %148 = vmatpush1.msra.mxu0 0.0
    %149 = vmatprep.subr.mxu0 0.0
    %150 = vmatpush1.msra.mxu0 0.0
    %151 = vmatprep.subr.mxu0 0.0
    %152 = vmatpush1.msra.mxu0 0.0
    %153 = vmatprep.subr.mxu0 0.0
    %154 = vmatpush1.msra.mxu0 0.0
    %155 = vmatprep.subr.mxu0 0.0
    %156 = vmatpush1.msra.mxu0 0.0
    %157 = vmatprep.subr.mxu0 0.0
    %158 = vmatpush1.msra.mxu0 0.0
    %159 = vmatprep.subr.mxu0 0.0
    %160 = vmatpush1.msra.mxu0 0.0
    %161 = vmatprep.subr.mxu0 0.0
    %162 = vmatpush1.msra.mxu0 0.0
    %163 = vmatprep.subr.mxu0 0.0
    %164 = vmatpush1.msra.mxu0 0.0
    %165 = vmatprep.mubr.f32.mxu0 0.0
    %166 = vmatmul.mubr.f32.gmra.mrb[0].mxu0 %v95
    %v167 = vpop.f32.mrb[0].mxu0
    %v168 = vadd.f32 0.0, %v167
    %v169 = vpop.f32.mrb[0].mxu0
    %170 = vdwg.mxu0
    %v171 = vld [vmem:[%s2] sm:$0xff]
    %vm172 = vcmask 15360
    %173 = vst.msk [vmem:[#allocation3] sm:$0xff] %vm172, %v171
    %175 = vrot.lane.b32.xlu0 %v168, 2
    %v176 = vpop.permute.xlu0 %175
    %vm178 = vcmask 130064
    %179 = vst.msk [vmem:[#allocation3] sm:$0xff] %vm178, %v176
    %181 = vrot.lane.b32.xlu0 %v171, 127
    %v182 = vpop.permute.xlu0 %181
    %vm184 = vcmask 7168
    %185 = vst.msk [vmem:[#allocation3 + $0x8] sm:$0xff] %vm184, %v182
    %186 = vrot.lane.b32.xlu0 %v168, 1
    %v187 = vpop.permute.xlu0 %186
    %vm189 = vcmask 130056
    %190 = vst.msk [vmem:[#allocation3 + $0x8] sm:$0xff] %vm189, %v187
    %vm191 = vcmask 130048
    %192 = vst.msk [vmem:[#allocation3 + $0x10] sm:$0xff] %vm191, %v168
    %193 = vrot.lane.b32.xlu0 %v168, 114
    %v194 = vpop.permute.xlu0 %193
    %196 = vst.msk [vmem:[%s7] sm:$0xff] %vm172, %v194
    %s197 = scalar_lea.vmem %s2, 8
    %v198 = vld [vmem:[%s197] sm:$0xff]
    %200 = vrot.lane.b32.xlu0 %v198, 16
    %v201 = vpop.permute.xlu0 %200
    %vm203 = vcmask 146560
    %204 = vst.msk [vmem:[#allocation3] sm:$0xff] %vm203, %v201
    %vm205 = vcmask 261264
    %206 = vst.msk [vmem:[#allocation3] sm:$0xff] %vm205, %v176
    %207 = vrot.lane.b32.xlu0 %v198, 15
    %v208 = vpop.permute.xlu0 %207
    %vm210 = vcmask 138368
    %211 = vst.msk [vmem:[#allocation3 + $0x8] sm:$0xff] %vm210, %v208
    %vm212 = vcmask 261256
    %213 = vst.msk [vmem:[#allocation3 + $0x8] sm:$0xff] %vm212, %v187
    %vm214 = vcmask 261248
    %215 = vst.msk [vmem:[#allocation3 + $0x10] sm:$0xff] %vm214, %v168
    %216 = vrot.lane.b32.xlu0 %v168, 98
    %v217 = vpop.permute.xlu0 %216
    %s219 = scalar_lea.vmem %s7, 8
    %220 = vst.msk [vmem:[%s219] sm:$0xff] %vm172, %v217
    %v221 = vld [vmem:[%s4] sm:$0xff]
    %v222 = vld [vmem:[#allocation3] sm:$0xff]
    %v223 = vld [vmem:[#allocation3 + $0x8] sm:$0xff]
    %v224 = vld [vmem:[#allocation3 + $0x10] sm:$0xff]
    %v225 = vld [vmem:[#allocation3 + $0x18] sm:$0x1]
    %vm226 = vcmask 203776
    %v228 = vsel %vm226, %v221, 0
    %vm230 = vcmask 1040384
    %v232 = vsel %vm230, %v225, 0
    %234 = vmatprep.subr.mxu0 0.0
    %235 = vmatpush1.msra.mxu0 %v222
    %236 = vmatprep.subr.mxu0 0.0
    %237 = vmatpush1.msra.mxu0 %v223
    %238 = vmatprep.subr.mxu0 0.0
    %239 = vmatpush1.msra.mxu0 %v224
    %240 = vmatprep.subr.mxu0 0.0
    %241 = vmatpush1.msra.mxu0 %v232
    %242 = vmatprep.subr.mxu0 0.0
    %243 = vmatpush1.msra.mxu0 0.0
    %244 = vmatprep.subr.mxu0 0.0
    %245 = vmatpush1.msra.mxu0 0.0
    %246 = vmatprep.subr.mxu0 0.0
    %247 = vmatpush1.msra.mxu0 0.0
    %248 = vmatprep.subr.mxu0 0.0
    %249 = vmatpush1.msra.mxu0 0.0
    %250 = vmatprep.subr.mxu0 0.0
    %251 = vmatpush1.msra.mxu0 0.0
    %252 = vmatprep.subr.mxu0 0.0
    %253 = vmatpush1.msra.mxu0 0.0
    %254 = vmatprep.subr.mxu0 0.0
    %255 = vmatpush1.msra.mxu0 0.0
    %256 = vmatprep.subr.mxu0 0.0
    %257 = vmatpush1.msra.mxu0 0.0
    %258 = vmatprep.subr.mxu0 0.0
    %259 = vmatpush1.msra.mxu0 0.0
    %260 = vmatprep.subr.mxu0 0.0
    %261 = vmatpush1.msra.mxu0 0.0
    %262 = vmatprep.subr.mxu0 0.0
    %263 = vmatpush1.msra.mxu0 0.0
    %264 = vmatprep.subr.mxu0 0.0
    %265 = vmatpush1.msra.mxu0 0.0
    %266 = vmatprep.subr.mxu0 0.0
    %267 = vmatpush1.msra.mxu0 0.0
    %268 = vmatprep.subr.mxu0 0.0
    %269 = vmatpush1.msra.mxu0 0.0
    %270 = vmatprep.subr.mxu0 0.0
    %271 = vmatpush1.msra.mxu0 0.0
    %272 = vmatprep.subr.mxu0 0.0
    %273 = vmatpush1.msra.mxu0 0.0
    %274 = vmatprep.subr.mxu0 0.0
    %275 = vmatpush1.msra.mxu0 0.0
    %276 = vmatprep.subr.mxu0 0.0
    %277 = vmatpush1.msra.mxu0 0.0
    %278 = vmatprep.subr.mxu0 0.0
    %279 = vmatpush1.msra.mxu0 0.0
    %280 = vmatprep.subr.mxu0 0.0
    %281 = vmatpush1.msra.mxu0 0.0
    %282 = vmatprep.subr.mxu0 0.0
    %283 = vmatpush1.msra.mxu0 0.0
    %284 = vmatprep.subr.mxu0 0.0
    %285 = vmatpush1.msra.mxu0 0.0
    %286 = vmatprep.subr.mxu0 0.0
    %287 = vmatpush1.msra.mxu0 0.0
    %288 = vmatprep.subr.mxu0 0.0
    %289 = vmatpush1.msra.mxu0 0.0
    %290 = vmatprep.subr.mxu0 0.0
    %291 = vmatpush1.msra.mxu0 0.0
    %292 = vmatprep.subr.mxu0 0.0
    %293 = vmatpush1.msra.mxu0 0.0
    %294 = vmatprep.subr.mxu0 0.0
    %295 = vmatpush1.msra.mxu0 0.0
    %296 = vmatprep.subr.mxu0 0.0
    %297 = vmatpush1.msra.mxu0 0.0
    %298 = vmatprep.mubr.f32.mxu0 0.0
    %299 = vmatmul.mubr.f32.gmra.mrb[0].mxu0 %v228
    %v300 = vpop.f32.mrb[0].mxu0
    %v301 = vadd.f32 0.0, %v300
    %v302 = vpop.f32.mrb[0].mxu0
    %303 = vdwg.mxu0
    %vm304 = vcmask 261120
    %305 = vst.msk [vmem:[#allocation4] sm:$0xff] %vm304, %v301
    // Predicated region
    $region22: #{tpu_custom_call.1} parent=1 // pred_check
      _
    $region23: #{tpu_custom_call.1} parent=1 // pred_check_branch
      %307 = sbr.rel (0) target = $region25
    $region24: #{tpu_custom_call.1} parent=1 // pred_region
      %s309 = ssub.s32 128, 128
      %310 = vsyncadd [#allocation5], %s309
      %s312 = sshll.u32 [#allocation4], 4
      %s313 = int_to_ptr.vmem [resolvable:$true] %s312
      %315 = dma.vmem_to_hbm [thread:$0]  %s313, 128, %s5, [#allocation5]
    $region25: #{tpu_custom_call.1} parent=1 // pred_fallthru
      _
    // Predicated region
    $region26: #{tpu_custom_call.1} parent=1 // pred_check
      _
    $region27: #{tpu_custom_call.1} parent=1 // pred_check_branch
      %317 = sbr.rel (0) target = $region29
    $region28: #{tpu_custom_call.1} parent=1 // pred_region
      _
    $region29: #{tpu_custom_call.1} parent=1 // pred_fallthru
      _
    // Predicated region
    $region30: #{tpu_custom_call.1} parent=1 // pred_check
      _
    $region31: #{tpu_custom_call.1} parent=1 // pred_check_branch
      %319 = sbr.rel (0) target = $region33
    $region32: #{tpu_custom_call.1} parent=1 // pred_region
      _
    $region33: #{tpu_custom_call.1} parent=1 // pred_fallthru
      _
    // Predicated region
    $region34: #{tpu_custom_call.1} parent=1 // pred_check
      _
    $region35: #{tpu_custom_call.1} parent=1 // pred_check_branch
      %321 = sbr.rel (0) target = $region37
    $region36: #{tpu_custom_call.1} parent=1 // pred_region
      %322 = dma.done [#allocation5], 128
    $region37: #{tpu_custom_call.1} parent=1 // pred_fallthru
      _
    // Predicated region
    $region38: #{tpu_custom_call.1} parent=1 // pred_check
      _
    $region39: #{tpu_custom_call.1} parent=1 // pred_check_branch
      %324 = sbr.rel (0) target = $region41
    $region40: #{tpu_custom_call.1} parent=1 // pred_region
      _
    $region41: #{tpu_custom_call.1} parent=1 // pred_fallthru
      _
    // Predicated region
    $region42: #{tpu_custom_call.1} parent=1 // pred_check
      _
    $region43: #{tpu_custom_call.1} parent=1 // pred_check_branch
      %326 = sbr.rel (0) target = $region45
    $region44: #{tpu_custom_call.1} parent=1 // pred_region
      _
    $region45: #{tpu_custom_call.1} parent=1 // pred_fallthru
      _
    %327 = vsyncpa [#allocation5], 1

</llo_original>
